<compile_context>
chip_gen: v5e
topology: v5e:2x2
jax: 0.10.0
libtpu: 0.0.40
codegen_flags: <defaults>
</compile_context>

<pallas_src>
import functools

import jax
import jax.numpy as jnp
from jax import lax
from jax.experimental import pallas as pl
from jax.experimental.pallas import tpu as pltpu


# ---------------------------------------------------------------------------
# helpers
# ---------------------------------------------------------------------------

def _round_up(x, m):
    return ((x + m - 1) // m) * m


def _device_kind():
    try:
        return jax.devices()[0].device_kind.lower()
    except Exception:
        return ""


def _chip_hints():
    """(tensorcores_per_chip, pass-2 tile-bytes target) from a defensive probe."""
    kind = _device_kind()
    if "v7" in kind or "7x" in kind:
        # v7x: 2 TensorCores per chip; ~3.2 TB/s HBM -> larger tiles needed to
        # amortize the ~0.35us per-grid-step overhead.
        return 2, 4 << 20
    return 1, 2 << 20


def _vmem_budget_bytes():
    """Per-generation VMEM budget with headroom (96 MiB v5e/v6e, 48 MiB v7x)."""
    cap = None
    try:
        cap = int(pltpu.get_tpu_info().vmem_capacity_bytes)
    except Exception:
        cap = None
    if not cap:
        kind = _device_kind()
        cap = (64 << 20) if ("v7" in kind or "7x" in kind) else (128 << 20)
    return min((cap * 3) // 4, 96 << 20)


# ---------------------------------------------------------------------------
# kernels
# ---------------------------------------------------------------------------

def _eca_fused_kernel(w_ref, x_ref, o_ref, ms_ref, *, inv_spatial):
    """Single pass: mean over S -> 3-tap channel conv -> sigmoid -> scale.

    w_ref : SMEM (3,) conv taps.
    x_ref / o_ref : VMEM (1, C, S) whole (channels, flattened-spatial) slab.
    ms_ref : VMEM (C + 2, 1) f32 scratch holding the zero-padded channel means.
    """
    c = x_ref.shape[1]
    m_col = jnp.sum(x_ref[0], axis=-1, keepdims=True,
                    dtype=jnp.float32) * inv_spatial              # (C, 1)

    # O(C) 3-tap conv over channels: place the means at sublane offset 1 inside a
    # zeroed (C+2, 1) buffer; the three taps are then plain shifted views (this
    # replaces the previous O(C^2) banded-mask multiply/reduce).
    ms_ref[...] = jnp.zeros_like(ms_ref)
    ms_ref[pl.ds(1, c), :] = m_col
    y = (w_ref[0] * ms_ref[pl.ds(0, c), :]        # m[c-1]  (zero at the low edge)
         + w_ref[1] * ms_ref[pl.ds(1, c), :]      # m[c]
         + w_ref[2] * ms_ref[pl.ds(2, c), :])     # m[c+1]  (zero at the high edge)
    gate = jax.nn.sigmoid(y)                                       # (C, 1) f32

    # Cast the tiny gate to the input dtype so the big broadcast multiply runs in
    # the narrow dtype on v6e/v7x (exact no-op for f32 inputs).
    o_ref[...] = (x_ref[...] * gate[None].astype(x_ref.dtype)).astype(o_ref.dtype)


def _eca_partial_sum_kernel(x_ref, o_ref, *, s_total, ts, tiles_per_split,
                            needs_mask):
    """Pass 1: accumulate per-channel sums over the spatial tiles of one (n, split).

    x_ref : VMEM (1, C, ts) spatial tile.
    o_ref : VMEM (1, 1, C, 1) f32 partial sums (resident across the tile axis).
    """
    p = pl.program_id(1)
    s = pl.program_id(2)

    @pl.when(s == 0)
    def _():
        o_ref[...] = jnp.zeros_like(o_ref)

    x = x_ref[0]                                   # (C, ts)
    if needs_mask:
        # Mask lanes past the true spatial extent (tail tile, and fully-OOB tiles
        # whose block index was clamped in the index_map -> limit <= 0).
        tile_id = p * tiles_per_split + s
        lane = lax.broadcasted_iota(jnp.int32, x.shape, 1)
        limit = s_total - tile_id * ts
        x = jnp.where(lane < limit, x, jnp.zeros((), x.dtype))

    o_ref[...] += jnp.sum(x, axis=-1, keepdims=True,
                          dtype=jnp.float32)[None, None]


def _eca_scale_kernel(g_ref, x_ref, o_ref):
    """Pass 2: lane-dense streaming read-multiply-write.

    g_ref : VMEM (1, C, 1) f32 gate (broadcast along lanes for free).
    x_ref / o_ref : VMEM (1, C, ts).
    """
    o_ref[...] = (x_ref[...] * g_ref[...].astype(x_ref.dtype)).astype(o_ref.dtype)


# ---------------------------------------------------------------------------
# wrapper
# ---------------------------------------------------------------------------

def eca_forward(x, conv_w, *, force_two_pass=False, force_splits=None,
                max_tile_lanes=None):
    """EfficientChannelAttention forward.

    x       : (N, C, D, H, W) activations.
    conv_w  : (3,) float32 — Conv1d(1, 1, k=3, bias=False) weight, squeezed.
    """
    N, C, D, H, W = x.shape
    S = D * H * W
    dtype = x.dtype
    itemsize = jnp.dtype(dtype).itemsize
    inv_spatial = 1.0 / float(S)

    n_tc, tile_target = _chip_hints()
    budget = _vmem_budget_bytes()

    # No host-side padding / slicing: blocks always span the full channel axis and
    # the spatial tail is handled in-kernel (mask) or by dropped OOB writes.
    x3 = x.reshape(N, C, S)

    # VMEM footprint of one whole (C, S) slab as Mosaic will pad it.
    slab_bytes = _round_up(C, 16) * _round_up(S, 128) * itemsize

    # Fused path: 2x HBM traffic (read + write) vs 3x for two-pass; needs the slab
    # double-buffered in + out (~4x) in VMEM.
    use_fused = (not force_two_pass) and (4 * slab_bytes + (1 << 20) <= budget)
    # On 2-TensorCore chips (v7x) a grid=(N,) kernel with N==1 runs on one core
    # only; prefer the two-pass kernels whose spatial axis keeps both cores busy.
    if use_fused and n_tc >= 2 and N < n_tc and slab_bytes > (1 << 20):
        use_fused = False

    if use_fused:
        kern = functools.partial(_eca_fused_kernel, inv_spatial=inv_spatial)
        out3 = pl.pallas_call(
            kern,
            out_shape=jax.ShapeDtypeStruct((N, C, S), dtype),
            grid=(N,),
            in_specs=[
                pl.BlockSpec(memory_space=pltpu.SMEM),             # conv taps
                pl.BlockSpec((1, C, S), lambda n: (n, 0, 0)),      # whole slab
            ],
            out_specs=pl.BlockSpec((1, C, S), lambda n: (n, 0, 0)),
            scratch_shapes=[pltpu.VMEM((C + 2, 1), jnp.float32)],
            compiler_params=pltpu.CompilerParams(
                dimension_semantics=("parallel",),
                vmem_limit_bytes=budget),
        )(conv_w, x3)
        return out3.reshape(N, C, D, H, W)

    # ------------------------------ two-pass path ------------------------------
    # Lane-dense spatial tile: multiple of 128, sized for ~tile_target bytes and
    # capped at budget/8 (double-buffered x in / x out plus resident gate/sums).
    row_bytes = max(1, C * itemsize)
    s128 = _round_up(S, 128)
    ts_cap = max(128, ((budget // 8) // row_bytes) // 128 * 128)
    ts_tgt = max(128, (tile_target // row_bytes) // 128 * 128)
    ts = min(ts_cap, ts_tgt, s128)
    if max_tile_lanes is not None:
        ts = min(ts, max(128, (max_tile_lanes // 128) * 128))
    num_s = pl.cdiv(S, ts)
    # Even split across the same number of tiles bounds tail waste to <128 lanes/tile.
    ts = _round_up(pl.cdiv(S, num_s), 128)
    num_s = pl.cdiv(S, ts)

    # Split the reduction over a second parallel axis when there are fewer batch
    # elements than TensorCores (v7x, N==1) so pass 1 also uses every core.
    splits = force_splits if force_splits else (n_tc if N < n_tc else 1)
    splits = max(1, min(splits, num_s))
    tpp = pl.cdiv(num_s, splits)                  # tiles per (n, split)
    needs_mask = (splits * tpp * ts) != S
    last_blk = num_s - 1

    if splits * tpp > num_s:
        # Overflow tiles of the last split: clamp the block index (stay in bounds);
        # the in-kernel mask zeroes their contribution entirely.
        x_map = lambda n, p, s: (n, 0, jnp.minimum(p * tpp + s, last_blk))
    else:
        x_map = lambda n, p, s: (n, 0, p * tpp + s)

    # Pass 1: fully parallel tiled reduction -> per-(N, split) channel sums.
    sum_kern = functools.partial(
        _eca_partial_sum_kernel, s_total=S, ts=ts, tiles_per_split=tpp,
        needs_mask=needs_mask)
    partial = pl.pallas_call(
        sum_kern,
        out_shape=jax.ShapeDtypeStruct((N, splits, C, 1), jnp.float32),
        grid=(N, splits, tpp),
        in_specs=[pl.BlockSpec((1, C, ts), x_map)],
        out_specs=pl.BlockSpec((1, 1, C, 1), lambda n, p, s: (n, p, 0, 0)),
        compiler_params=pltpu.CompilerParams(
            dimension_semantics=("parallel", "parallel", "arbitrary"),
            vmem_limit_bytes=budget),
    )(x3)

    # Tiny O(N*C) finish (means -> zero-padded 3-tap conv -> sigmoid), left to XLA
    # so pass 1 stays a fully parallel reduction on every TensorCore.
    means = jnp.sum(partial[..., 0], axis=1) * inv_spatial          # (N, C)
    mp = jnp.pad(means, ((0, 0), (1, 1)))
    y = conv_w[0] * mp[:, :-2] + conv_w[1] * mp[:, 1:-1] + conv_w[2] * mp[:, 2:]
    gate = jax.nn.sigmoid(y)[:, :, None].astype(jnp.float32)        # (N, C, 1)

    # Pass 2: streaming scale; OOB writes of the spatial tail block are dropped.
    out3 = pl.pallas_call(
        _eca_scale_kernel,
        out_shape=jax.ShapeDtypeStruct((N, C, S), dtype),
        grid=(N, num_s),
        in_specs=[
            pl.BlockSpec((1, C, 1), lambda n, s: (n, 0, 0)),        # gate (resident)
            pl.BlockSpec((1, C, ts), lambda n, s: (n, 0, s)),       # x tile
        ],
        out_specs=pl.BlockSpec((1, C, ts), lambda n, s: (n, 0, s)),
        compiler_params=pltpu.CompilerParams(
            dimension_semantics=("parallel", "parallel"),
            vmem_limit_bytes=budget),
    )(gate, x3)
    return out3.reshape(N, C, D, H, W)


# ---------------------------------------------------------------------------
# reference + tests
# ---------------------------------------------------------------------------

def eca_reference(x, conv_w):
    """Pure-JAX reference mirroring the PyTorch ECA forward."""
    m = jnp.mean(x, axis=(2, 3, 4))                  # (N, C) == AdaptiveAvgPool3d(1)
    mp = jnp.pad(m, ((0, 0), (1, 1)))                # zero pad channel axis
    y = conv_w[0] * mp[:, :-2] + conv_w[1] * mp[:, 1:-1] + conv_w[2] * mp[:, 2:]
    a = jax.nn.sigmoid(y)                            # (N, C)
    return x * a[:, :, None, None, None]


if __name__ == "__main__":
    key = jax.random.PRNGKey(0)
    kx, kw, kx2, kx3, kx4 = jax.random.split(key, 5)

    # Conv1d(1, 1, kernel_size=3, bias=False) weight: (1, 1, 3) squeezed to (3,).
    k_size = 3
    bound = 1.0 / (1 * k_size) ** 0.5                # PyTorch default uniform bound
    conv_w = jax.random.uniform(kw, (k_size,), dtype=jnp.float32,
                                minval=-bound, maxval=bound)

    # 1) Fused single-pass path (whole slab in VMEM), f32.
    x = jax.random.normal(kx, (2, 8, 4, 4, 4), dtype=jnp.float32)
    out = jax.block_until_ready(eca_forward(x, conv_w))
    ref = eca_reference(x, conv_w)
    assert out.shape == x.shape
    assert jnp.allclose(out, ref, atol=1e-5, rtol=1e-4), "fused path mismatch"

    # 2) Two-pass path: multi-tile reduction with masked spatial tail (S=144, ts=128).
    x2 = jax.random.normal(kx2, (2, 12, 2, 8, 9), dtype=jnp.float32)
    out2 = jax.block_until_ready(
        eca_forward(x2, conv_w, force_two_pass=True, max_tile_lanes=128))
    ref2 = eca_reference(x2, conv_w)
    assert out2.shape == x2.shape
    assert jnp.allclose(out2, ref2, atol=1e-5, rtol=1e-4), "two-pass path mismatch"

    # 3) Two-pass path with the reduction split over two parallel groups (the
    #    v7x N==1 layout), including a fully-out-of-range clamped tile.
    x3 = jax.random.normal(kx3, (1, 12, 2, 9, 16), dtype=jnp.float32)
    out3 = jax.block_until_ready(
        eca_forward(x3, conv_w, force_two_pass=True, force_splits=2,
                    max_tile_lanes=128))
    ref3 = eca_reference(x3, conv_w)
    assert jnp.allclose(out3, ref3, atol=1e-5, rtol=1e-4), "split-reduction mismatch"

    # 4) bf16 fused path (gate cast to the narrow dtype before the scale).
    x4f = jax.random.normal(kx4, (1, 16, 2, 4, 8), dtype=jnp.float32)
    x4 = x4f.astype(jnp.bfloat16)
    out4 = jax.block_until_ready(eca_forward(x4, conv_w))
    ref4 = eca_reference(x4.astype(jnp.float32), conv_w)
    assert jnp.allclose(out4.astype(jnp.float32), ref4, atol=2e-2, rtol=2e-2), \
        "bf16 fused path mismatch"

    print("KERNEL_OK")
</pallas_src>

<mosaic_0001>
module attributes {stable_mosaic.version = 11 : i64} {
  func.func @_eca_fused_kernel(%arg0: i32, %arg1: memref<3xf32, #tpu.memory_space<smem>>, %arg2: memref<1x8x64xf32, #tpu.memory_space<vmem>>, %arg3: memref<1x8x64xf32, #tpu.memory_space<vmem>>, %arg4: memref<10x1xf32, #tpu.memory_space<vmem>>) attributes {dimension_semantics = [#tpu.dimension_semantics<parallel>], iteration_bounds = array<i64: 2>, scalar_prefetch = 0 : i64, scratch_operands = 1 : i64, tpu.core_type = #tpu.core_type<tc>, window_params = [{transform_indices = @transform_0, window_bounds = array<i64: 3>}, {transform_indices = @transform_1, window_bounds = array<i64: 1, 8, 64>}, {transform_indices = @transform_2, window_bounds = array<i64: 1, 8, 64>}]} {
    %c0 = arith.constant 0 : index
    %c0_0 = arith.constant 0 : index
    %c0_1 = arith.constant 0 : index
    %0 = vector.load %arg2[%c0, %c0_0, %c0_1] : memref<1x8x64xf32, #tpu.memory_space<vmem>>, vector<1x8x64xf32>
    %1 = vector.shape_cast %0 : vector<1x8x64xf32> to vector<8x64xf32>
    %cst = arith.constant dense<0.000000e+00> : vector<8xf32>
    %2 = vector.multi_reduction <add>, %1, %cst [1] : vector<8x64xf32> to vector<8xf32>
    %3 = vector.shape_cast %2 : vector<8xf32> to vector<8x1xf32>
    %cst_2 = arith.constant 1.562500e-02 : f32
    %4 = vector.broadcast %cst_2 : f32 to vector<8x1xf32>
    %5 = arith.mulf %3, %4 : vector<8x1xf32>
    %cst_3 = arith.constant 0.000000e+00 : f32
    %6 = vector.broadcast %cst_3 : f32 to vector<10x1xf32>
    %c0_4 = arith.constant 0 : index
    %c0_5 = arith.constant 0 : index
    %7 = vector.load %arg4[%c0_4, %c0_5] : memref<10x1xf32, #tpu.memory_space<vmem>>, vector<10x1xf32>
    tpu.vector_store %arg4[%c0_4, %c0_5], %6 {strides = array<i32>} : memref<10x1xf32, #tpu.memory_space<vmem>>, vector<10x1xf32>,
    %c1 = arith.constant 1 : index
    %c0_6 = arith.constant 0 : index
    %8 = vector.load %arg4[%c1, %c0_6] : memref<10x1xf32, #tpu.memory_space<vmem>>, vector<8x1xf32>
    tpu.vector_store %arg4[%c1, %c0_6], %5 {strides = array<i32>} : memref<10x1xf32, #tpu.memory_space<vmem>>, vector<8x1xf32>,
    %c0_7 = arith.constant 0 : index
    %9 = memref.load %arg1[%c0_7] : memref<3xf32, #tpu.memory_space<smem>>
    %c0_8 = arith.constant 0 : index
    %c0_9 = arith.constant 0 : index
    %10 = vector.load %arg4[%c0_8, %c0_9] : memref<10x1xf32, #tpu.memory_space<vmem>>, vector<8x1xf32>
    %11 = vector.broadcast %9 : f32 to vector<8x1xf32>
    %12 = arith.mulf %11, %10 : vector<8x1xf32>
    %c1_10 = arith.constant 1 : index
    %13 = memref.load %arg1[%c1_10] : memref<3xf32, #tpu.memory_space<smem>>
    %c1_11 = arith.constant 1 : index
    %c0_12 = arith.constant 0 : index
    %14 = vector.load %arg4[%c1_11, %c0_12] : memref<10x1xf32, #tpu.memory_space<vmem>>, vector<8x1xf32>
    %15 = vector.broadcast %13 : f32 to vector<8x1xf32>
    %16 = arith.mulf %15, %14 : vector<8x1xf32>
    %17 = arith.addf %12, %16 : vector<8x1xf32>
    %c2 = arith.constant 2 : index
    %18 = memref.load %arg1[%c2] : memref<3xf32, #tpu.memory_space<smem>>
    %c2_13 = arith.constant 2 : index
    %c0_14 = arith.constant 0 : index
    %19 = vector.load %arg4[%c2_13, %c0_14] : memref<10x1xf32, #tpu.memory_space<vmem>>, vector<8x1xf32>
    %20 = vector.broadcast %18 : f32 to vector<8x1xf32>
    %21 = arith.mulf %20, %19 : vector<8x1xf32>
    %22 = arith.addf %17, %21 : vector<8x1xf32>
    %23 = arith.negf %22 : vector<8x1xf32>
    %24 = math.exp %23 : vector<8x1xf32>
    %cst_15 = arith.constant 1.000000e+00 : f32
    %25 = vector.broadcast %cst_15 : f32 to vector<8x1xf32>
    %26 = arith.addf %25, %24 : vector<8x1xf32>
    %27 = arith.divf %25, %26 : vector<8x1xf32>
    %c0_16 = arith.constant 0 : index
    %c0_17 = arith.constant 0 : index
    %c0_18 = arith.constant 0 : index
    %28 = vector.load %arg2[%c0_16, %c0_17, %c0_18] : memref<1x8x64xf32, #tpu.memory_space<vmem>>, vector<1x8x64xf32>
    %29 = vector.shape_cast %27 : vector<8x1xf32> to vector<1x8x1xf32>
    %30 = vector.broadcast %29 : vector<1x8x1xf32> to vector<1x8x64xf32>
    %31 = arith.mulf %28, %30 : vector<1x8x64xf32>
    %c0_19 = arith.constant 0 : index
    %c0_20 = arith.constant 0 : index
    %c0_21 = arith.constant 0 : index
    %32 = vector.load %arg3[%c0_19, %c0_20, %c0_21] : memref<1x8x64xf32, #tpu.memory_space<vmem>>, vector<1x8x64xf32>
    tpu.vector_store %arg3[%c0_19, %c0_20, %c0_21], %31 {strides = array<i32>} : memref<1x8x64xf32, #tpu.memory_space<vmem>>, vector<1x8x64xf32>,
    return
  }
  func.func @transform_0(%arg0: i32) -> i32 {
    %c0_i32 = arith.constant 0 : i32
    %c0_i32_0 = arith.constant 0 : i32
    return %c0_i32 : i32
  }
  func.func @transform_1(%arg0: i32) -> (i32, i32, i32) {
    %c0_i32 = arith.constant 0 : i32
    %c0_i32_0 = arith.constant 0 : i32
    %c0_i32_1 = arith.constant 0 : i32
    return %arg0, %c0_i32, %c0_i32_0 : i32, i32, i32
  }
  func.func @transform_2(%arg0: i32) -> (i32, i32, i32) {
    %c0_i32 = arith.constant 0 : i32
    %c0_i32_0 = arith.constant 0 : i32
    %c0_i32_1 = arith.constant 0 : i32
    return %arg0, %c0_i32, %c0_i32_0 : i32, i32, i32
  }
}

</mosaic_0001>

<llo_original>
// kernel: tpu_custom_call.1
$region0: #{tpu_custom_call.1}
  #allocation0 [shape = 'u32[]', space=smem, size = 0x4, offset = 0x4, fixed_abs, tag = 'smem constant byte address 0x4 - core index']
  #allocation1 [shape = 'u32[72,128]{1,0:T(1,128)}', space=vmem, size = 0x9000, scoped, tag = 'internal scratch']
  #allocation2 [shape = 'f32[10,1]{1,0:T(8,128)}', space=vmem, size = 0x2000, scoped, tag = 'scratch operand']
  %s0 = inlined_call_operand.hbm [shape: f32[3], index: 0, kind: input, shape index: {}]
  %s1 = inlined_call_operand.hbm [shape: f32[2,8,64], index: 1, kind: input, shape index: {}]
  %s2 = inlined_call_operand.hbm [shape: f32[2,8,64], index: 2, kind: output, shape index: {}]
  %s3 = sld [smem:[#allocation0]]
  $region49: #{tpu_custom_call.1} parent=0
    _
  %s5 = ssub.s32 1, %s3
  %s6 = scalar_select 0, %s5, %s3
  $region1: #{tpu_custom_call.1} parent=0
    #allocation3 [shape = 'u8[512]{0}', space=smem, size = 0x200, scoped, tag = 'input window, operand 0, single buffered']
    #allocation4 [shape = 's32[2]{0}', space=sflag, size = 0x8, scoped, tag = 'scoped memory for tpu_custom_call.1']
    #allocation5 [shape = 's32[2]{0}', space=sflag, size = 0x8, scoped, tag = 'scoped memory for tpu_custom_call.1']
    #allocation6 [shape = 's32[2]{0}', space=sflag, size = 0x8, scoped, tag = 'scoped memory for tpu_custom_call.1']
    #allocation7 [shape = 'u8[8192]{0}', space=vmem, size = 0x2000, scoped, tag = 'input window, operand 1']
    #allocation8 [shape = 'u8[8192]{0}', space=vmem, size = 0x2000, scoped, tag = 'output window, operand 0']
    %7 = vsyncpa [#allocation6], 0
    %8 = vsyncpa [#allocation4], 0
    %s9 = scalar_lea.sflag [#allocation4], 1
    %10 = vsyncpa %s9, 0
    %11 = vsyncpa [#allocation5], 0
    %s12 = scalar_lea.sflag [#allocation5], 1
    %13 = vsyncpa %s12, 0
    loop: start=0, step=1, limit=4
    $region2: #{tpu_custom_call.1} parent=1 // loop_pre_header
      _
    $region3: #{tpu_custom_call.1} parent=1 // loop_header
      %s15 = sphi 0, %s19
      %p16 = scmp.ge.s32.totalorder %s15, 4
      %s23 = sphi 0, %s23
      %s25 = sphi 0, %s23
      %s26 = sphi 0, %s25
      %s40 = sphi 0, %s26
      %s46 = sphi 0, %s48
      %s49 = sphi 0, %s46
      %s50 = sphi 0, %s49
      %s66 = sphi 0, %s50
      %s72 = sphi 0, %s74
      %s75 = sphi 0, %s72
      %s76 = sphi 0, %s75
      %s92 = sphi 0, %s76
    $region4: #{tpu_custom_call.1} parent=1 // loop_header_branch
      %18 = sbr.rel (%p16) target = $region8
    $region5: #{tpu_custom_call.1} parent=1 // loop_body
      %s20 = ssub.s32 %s15, 1
      %s21 = ssub.s32 %s15, 2
      %s22 = sadd.s32 %s15, 1
      %s24 = sadd.s32 %s23, 1
      %p27 = scmp.eq.s32.totalorder %s15, 1
      %p28 = scmp.ne.s32.totalorder %s23, %s25
      %p29 = scmp.eq.s32.totalorder %s15, 0
      %p30 = por %p28, %p29
      %p31 = scmp.ne.s32.totalorder %s23, %s25
      %p32 = scmp.eq.s32.totalorder %s20, 1
      %p33 = por %p31, %p32
      %p34 = scmp.ne.s32.totalorder %s25, %s26
      %p35 = scmp.eq.s32.totalorder %s20, 0
      %p36 = por %p34, %p35
      %p37 = scmp.ne.s32.totalorder %s25, %s26
      %p38 = scmp.eq.s32.totalorder %s21, 1
      %p39 = por %p37, %p38
      %p41 = scmp.ne.s32.totalorder %s26, %s40
      %p42 = scmp.eq.s32.totalorder %s21, 0
      %p43 = por %p41, %p42
      %s44 = ssub.s32 %s15, %s22
      %p45 = scmp.eq.s32.totalorder %s44, 0
      %s47 = sadd.s32 %s46, 1
      %s48 = scalar_select %p45, %s46, %s47
      %p51 = pneg %p45
      %p52 = scmp.eq.s32.totalorder %s15, 1
      %p53 = por %p51, %p52
      %p54 = scmp.ne.s32.totalorder %s46, %s49
      %p55 = scmp.eq.s32.totalorder %s15, 0
      %p56 = por %p54, %p55
      %p57 = scmp.ne.s32.totalorder %s46, %s49
      %p58 = scmp.eq.s32.totalorder %s20, 1
      %p59 = por %p57, %p58
      %p60 = scmp.ne.s32.totalorder %s49, %s50
      %p61 = scmp.eq.s32.totalorder %s20, 0
      %p62 = por %p60, %p61
      %p63 = scmp.ne.s32.totalorder %s49, %s50
      %p64 = scmp.eq.s32.totalorder %s21, 1
      %p65 = por %p63, %p64
      %p67 = scmp.ne.s32.totalorder %s50, %s66
      %p68 = scmp.eq.s32.totalorder %s21, 0
      %p69 = por %p67, %p68
      %s70 = ssub.s32 %s15, %s22
      %p71 = scmp.eq.s32.totalorder %s70, 0
      %s73 = sadd.s32 %s72, 1
      %s74 = scalar_select %p71, %s72, %s73
      %p77 = pneg %p71
      %p78 = scmp.eq.s32.totalorder %s15, 1
      %p79 = por %p77, %p78
      %p80 = scmp.ne.s32.totalorder %s72, %s75
      %p81 = scmp.eq.s32.totalorder %s15, 0
      %p82 = por %p80, %p81
      %p83 = scmp.ne.s32.totalorder %s72, %s75
      %p84 = scmp.eq.s32.totalorder %s20, 1
      %p85 = por %p83, %p84
      %p86 = scmp.ne.s32.totalorder %s75, %s76
      %p87 = scmp.eq.s32.totalorder %s20, 0
      %p88 = por %p86, %p87
      %p89 = scmp.ne.s32.totalorder %s75, %s76
      %p90 = scmp.eq.s32.totalorder %s21, 1
      %p91 = por %p89, %p90
      %p93 = scmp.ne.s32.totalorder %s76, %s92
      %p94 = scmp.eq.s32.totalorder %s21, 0
      %p95 = por %p93, %p94
      %p96 = scmp.le.s32.totalorder 1, %s15
      %p97 = scmp.lt.s32.totalorder %s15, 3
      %p98 = pnand %p96, %p97
      %p99 = pneg %p98
      // Predicated region
      $region9: #{tpu_custom_call.1} parent=5 // pred_check
        _
      $region10: #{tpu_custom_call.1} parent=5 // pred_check_branch
        %101 = sbr.rel (%p98) target = $region12
      $region11: #{tpu_custom_call.1} parent=5 // pred_region
        %s102 = ssub.s32 %s15, 1
        // Predicated region
        $region13: #{tpu_custom_call.1} parent=11 // pred_check
          %p103 = pneg %p36
        $region14: #{tpu_custom_call.1} parent=11 // pred_check_branch
          %105 = sbr.rel (%p103) target = $region16
        $region15: #{tpu_custom_call.1} parent=11 // pred_region
          %107 = vsyncadd [#allocation6], 0
          %s109 = sshll.u32 %s0, 4
          %s110 = int_to_ptr.hbm [resolvable:$true] %s109
          %112 = dma.hbm_to_smem %s110, 16, [#allocation3], [#allocation6]
        $region16: #{tpu_custom_call.1} parent=11 // pred_fallthru
          _
      $region12: #{tpu_custom_call.1} parent=5 // pred_fallthru
        _
      %p113 = scmp.lt.s32.totalorder %s15, 2
      // Predicated region
      $region17: #{tpu_custom_call.1} parent=5 // pred_check
        %p114 = pneg %p113
      $region18: #{tpu_custom_call.1} parent=5 // pred_check_branch
        %116 = sbr.rel (%p114) target = $region20
      $region19: #{tpu_custom_call.1} parent=5 // pred_region
        // Predicated region
        $region21: #{tpu_custom_call.1} parent=19 // pred_check
          %p117 = pneg %p56
        $region22: #{tpu_custom_call.1} parent=19 // pred_check_branch
          %119 = sbr.rel (%p117) target = $region24
        $region23: #{tpu_custom_call.1} parent=19 // pred_region
          %s120 = sand.u32 %s46, 1
          %s121 = scalar_lea.sflag [#allocation4], %s120
          %s122 = sand.u32 %s46, 1
          %s123 = smul.addr %s122, 8
          %s124 = scalar_lea.vmem [#allocation7], %s123
          %126 = vsyncadd %s121, 0
          %s127 = smul.addr %s15, 8
          %s128 = scalar_lea.hbm %s1, %s127
          %s130 = sshll.u32 %s128, 4
          %s131 = int_to_ptr.hbm [resolvable:$true] %s130
          %s132 = sshll.u32 %s124, 4
          %s133 = int_to_ptr.vmem [resolvable:$true] %s132
          %135 = dma.hbm_to_vmem [thread:$0]  %s131, 128, %s133, %s121
        $region24: #{tpu_custom_call.1} parent=19 // pred_fallthru
          _
      $region20: #{tpu_custom_call.1} parent=5 // pred_fallthru
        _
      %p136 = scmp.le.s32.totalorder 1, %s15
      %p137 = scmp.lt.s32.totalorder %s15, 3
      %p138 = pnand %p136, %p137
      %p139 = pneg %p138
      // Predicated region
      $region25: #{tpu_custom_call.1} parent=5 // pred_check
        _
      $region26: #{tpu_custom_call.1} parent=5 // pred_check_branch
        %141 = sbr.rel (%p138) target = $region28
      $region27: #{tpu_custom_call.1} parent=5 // pred_region
        %s142 = ssub.s32 %s15, 1
        // Predicated region
        $region29: #{tpu_custom_call.1} parent=27 // pred_check
          %p143 = pneg %p36
        $region30: #{tpu_custom_call.1} parent=27 // pred_check_branch
          %145 = sbr.rel (%p143) target = $region32
        $region31: #{tpu_custom_call.1} parent=27 // pred_region
          %147 = dma.done [#allocation6], 16
        $region32: #{tpu_custom_call.1} parent=27 // pred_fallthru
          _
        %s148 = sand.u32 %s49, 1
        %s149 = scalar_lea.sflag [#allocation4], %s148
        %s150 = sand.u32 %s49, 1
        %s151 = smul.addr %s150, 8
        %s152 = scalar_lea.vmem [#allocation7], %s151
        // Predicated region
        $region33: #{tpu_custom_call.1} parent=27 // pred_check
          %p153 = pneg %p62
        $region34: #{tpu_custom_call.1} parent=27 // pred_check_branch
          %155 = sbr.rel (%p153) target = $region36
        $region35: #{tpu_custom_call.1} parent=27 // pred_region
          %157 = dma.done %s149, 128
        $region36: #{tpu_custom_call.1} parent=27 // pred_fallthru
          _
        %158 = sfence
        %p159 = pneg %p36
        %p160 = pneg %p33
        %s161 = sand.u32 %s49, 1
        %s162 = scalar_lea.sflag [#allocation4], %s161
        %s163 = sand.u32 %s49, 1
        %s164 = smul.addr %s163, 8
        %s165 = scalar_lea.vmem [#allocation7], %s164
        %p166 = pneg %p62
        %p167 = pneg %p59
        %p168 = pneg %p88
        %p169 = pneg %p85
        %s170 = sand.u32 %s75, 1
        %s171 = scalar_lea.sflag [#allocation5], %s170
        %s172 = sand.u32 %s75, 1
        %s173 = smul.addr %s172, 8
        %s174 = scalar_lea.vmem [#allocation8], %s173
        %v175 = vld [vmem:[%s152] sm:$0xff]
        %vm176 = vcmask 523264
        %v177 = vsel %vm176, %v175, 0.0
        %178 = vadd.xlane.f32.xlu0 %v177
        %v179 = vpop.xlane.xlu0 %178
        %v180 = vmul.f32 %v179, 0.015625
        %vm181 = vcmask 7168
        %182 = vst.msk [vmem:[#allocation2] sm:$0xff] %vm181, 0.0
        %vm183 = vcmask 1024
        %184 = vst.msk [vmem:[#allocation2 + $0x8] sm:$0x3] %vm183, 0.0
        %185 = vst.msk [vmem:[#allocation2 + $0x1] sm:$0xff] %vm181, %v180
        %s186 = sld [smem:[#allocation3]]
        %v187 = vld [vmem:[#allocation2] sm:$0xff]
        %v188 = vstv %s186
        %v189 = vmul.f32 %v188, %v187
        %s190 = sld [smem:[#allocation3 + $0x1]]
        %v191 = vld [vmem:[#allocation2 + $0x1] sm:$0xff]
        %v192 = vstv %s190
        %v193 = vmul.f32 %v192, %v191
        %v194 = vadd.f32 %v189, %v193
        %s195 = sld [smem:[#allocation3 + $0x2]]
        %v196 = vld [vmem:[#allocation2 + $0x2] sm:$0xff]
        %v197 = vstv %s195
        %v198 = vmul.f32 %v197, %v196
        %v199 = vadd.f32 %v194, %v198
        %v200 = vxor.u32 %v199, 2147483648
        %v201 = vmul.f32 %v200, 1.442695
        %v202 = vpow.pop %v201
        %v203 = vadd.f32 %v202, 1.0
        %v204 = vrcp.pop %v203
        %v205 = vmul.f32 %v203, %v204
        %v206 = vsub.f32 1.0, %v205
        %v207 = vmul.f32 %v204, %v206
        %v208 = vadd.f32 %v204, %v207
        %vm209 = vweird.f32 %v203
        %vm210 = vweird.f32 %v204
        %vm211 = vmor %vm209, %vm210
        %v212 = vsel %vm211, %v204, %v208
        %v213 = vand.u32 2147483647, %v203
        %vm214 = vcmp.eq.f32.partialorder %v213, 8.507059e+37
        %v215 = vand.u32 %v203, 2147483648
        %v216 = vor.u32 1.1754944e-38, %v215
        %v217 = vsel %vm214, %v216, %v212
        %v218 = vmul.f32 1.0, %v217
        %v219 = vld [vmem:[%s152] sm:$0xff]
        %221 = vset.pattern.permute.xlu0 0
        %222 = vperm.xlu0 %221, %v218
        %v223 = vpop.permute.xlu0 %222
        %v225 = vmul.f32 %v219, %v223
        %226 = vst.msk [vmem:[%s174] sm:$0xff] %vm176, %v225
        %s227 = sand.u32 %s75, 1
        %s228 = scalar_lea.sflag [#allocation5], %s227
        %s229 = sand.u32 %s75, 1
        %s230 = smul.addr %s229, 8
        %s231 = scalar_lea.vmem [#allocation8], %s230
        // Predicated region
        $region37: #{tpu_custom_call.1} parent=27 // pred_check
          %p232 = pneg %p85
        $region38: #{tpu_custom_call.1} parent=27 // pred_check_branch
          %234 = sbr.rel (%p232) target = $region40
        $region39: #{tpu_custom_call.1} parent=27 // pred_region
          %236 = vsyncadd %s228, 0
          %s237 = smul.addr %s20, 8
          %s238 = scalar_lea.hbm %s2, %s237
          %s240 = sshll.u32 %s231, 4
          %s241 = int_to_ptr.vmem [resolvable:$true] %s240
          %s242 = sshll.u32 %s238, 4
          %s243 = int_to_ptr.hbm [resolvable:$true] %s242
          %245 = dma.vmem_to_hbm [thread:$0]  %s241, 128, %s243, %s228
        $region40: #{tpu_custom_call.1} parent=27 // pred_fallthru
          _
      $region28: #{tpu_custom_call.1} parent=5 // pred_fallthru
        _
      %p246 = scmp.le.s32.totalorder 2, %s15
      // Predicated region
      $region41: #{tpu_custom_call.1} parent=5 // pred_check
        %p247 = pneg %p246
      $region42: #{tpu_custom_call.1} parent=5 // pred_check_branch
        %249 = sbr.rel (%p247) target = $region44
      $region43: #{tpu_custom_call.1} parent=5 // pred_region
        %s250 = ssub.s32 %s15, 2
        // Predicated region
        $region45: #{tpu_custom_call.1} parent=43 // pred_check
          %p251 = pneg %p91
        $region46: #{tpu_custom_call.1} parent=43 // pred_check_branch
          %253 = sbr.rel (%p251) target = $region48
        $region47: #{tpu_custom_call.1} parent=43 // pred_region
          %s254 = sand.u32 %s76, 1
          %s255 = scalar_lea.sflag [#allocation5], %s254
          %s256 = sand.u32 %s76, 1
          %s257 = smul.addr %s256, 8
          %s258 = scalar_lea.vmem [#allocation8], %s257
          %260 = dma.done %s255, 128
        $region48: #{tpu_custom_call.1} parent=43 // pred_fallthru
          _
      $region44: #{tpu_custom_call.1} parent=5 // pred_fallthru
        _
    $region6: #{tpu_custom_call.1} parent=1 // loop_footer
      %s19 = sadd.s32 1, %s15
    $region7: #{tpu_custom_call.1} parent=1 // loop_footer_branch
      %14 = sbr.rel target = $region3
    $region8: #{tpu_custom_call.1} parent=1 // loop_exit
      _
    %261 = vsyncpa [#allocation4], 1
    %s262 = scalar_lea.sflag [#allocation4], 1
    %263 = vsyncpa %s262, 1
    %264 = vsyncpa [#allocation5], 1
    %s265 = scalar_lea.sflag [#allocation5], 1
    %266 = vsyncpa %s265, 1
    %267 = vsyncpa [#allocation6], 1
    %s268 = scalar_lea.sflag [#allocation6], 1
    %269 = vsyncpa %s268, 1

</llo_original>
